<compile_context>
chip_gen: v7x
topology: tpu7x:2x2x1
jax: 0.10.0
libtpu: 0.0.40
codegen_flags: <defaults>
</compile_context>

<pallas_src>
import functools

import jax
import jax.numpy as jnp
from jax import lax
from jax.experimental import pallas as pl
from jax.experimental.pallas import tpu as pltpu

BN_EPS = 1e-5
_LANES = 512          # lane-dense slab width (multiple of 128)
_MAX_TILE_ROWS = 512  # rows per grid step (multiple of 8); 512x512 f32 = 1 MiB tile


def _cdiv(a, b):
    return (a + b - 1) // b


def _round_up(a, b):
    return ((a + b - 1) // b) * b


def _lane_dense_slab(flat, lanes, max_tile_rows):
    """Pad a flat f32 vector into a (num_tiles * tile_rows, lanes) lane-dense slab."""
    n = flat.shape[0]
    rows = max(_cdiv(n, lanes), 1)
    tile_rows = min(max_tile_rows, _round_up(rows, 8))
    num_tiles = _cdiv(rows, tile_rows)
    padded_rows = num_tiles * tile_rows
    pad = padded_rows * lanes - n
    flat = jnp.pad(flat, (0, pad))
    return flat.reshape(padded_rows, lanes), num_tiles, tile_rows


def _stats_kernel(params_ref, x_ref, psum_ref, psq_ref, *, total, tile_rows, lanes):
    """Pass 1: per-lane partial sum / sum-of-squares of y = conv2(relu(conv1(x)))
    over the /4-subsampled slab (what BatchNorm sees).

    params_ref: SMEM f32[8] = [w1, b1, w2, b2, gamma, beta, w3, b3]
    x_ref:      VMEM f32[tile_rows, lanes] lane-dense tile of x[::4, ::4]
    psum_ref:   VMEM f32[1, lanes] accumulator (per-lane sum, padding masked to 0)
    psq_ref:    VMEM f32[1, lanes] accumulator (per-lane sum of squares)
    """
    i = pl.program_id(0)

    w1 = params_ref[0]
    b1 = params_ref[1]
    w2 = params_ref[2]
    b2 = params_ref[3]

    x = x_ref[...]
    y = w2 * jnp.maximum(w1 * x + b1, 0.0) + b2

    # Mask the flat-padding tail so it contributes exactly zero to the statistics.
    r = lax.broadcasted_iota(jnp.int32, (tile_rows, lanes), 0)
    c = lax.broadcasted_iota(jnp.int32, (tile_rows, lanes), 1)
    flat_idx = (i * tile_rows + r) * lanes + c
    y = jnp.where(flat_idx < total, y, 0.0)

    @pl.when(i == 0)
    def _():
        psum_ref[...] = jnp.zeros_like(psum_ref)
        psq_ref[...] = jnp.zeros_like(psq_ref)

    psum_ref[...] += jnp.sum(y, axis=0, keepdims=True)
    psq_ref[...] += jnp.sum(y * y, axis=0, keepdims=True)


def _out_kernel(coef_ref, x_ref, o_ref):
    """Pass 2: out = a * (w2*relu(w1*x + b1) + b2) + c on the /8 (kept) positions.

    coef_ref: SMEM f32[6] = [w1, b1, w2, b2, a, c] where BN + conv3 have been folded
              into a single affine (a, c).
    """
    w1 = coef_ref[0]
    b1 = coef_ref[1]
    w2 = coef_ref[2]
    b2 = coef_ref[3]
    a = coef_ref[4]
    c = coef_ref[5]

    x = x_ref[...]
    y = w2 * jnp.maximum(w1 * x + b1, 0.0) + b2
    o_ref[...] = a * y + c


def model_forward(x, params):
    """x: (N, 1, H, W) float32 with H % 8 == 0, W % 8 == 0.  params: f32[8]."""
    N, C, H, W = x.shape
    assert C == 1 and H % 8 == 0 and W % 8 == 0
    x = x.astype(jnp.float32)

    # Stride composition (pure data movement; 1x1 affines / ReLU commute with it):
    #   conv1*conv2 strides  -> every 4th pixel feeds the BatchNorm statistics,
    #   conv1*conv2*conv3    -> every 8th pixel survives to the final output.
    x4 = x[:, :, ::4, ::4]
    x8 = x4[:, :, ::2, ::2]
    H8, W8 = x8.shape[2], x8.shape[3]
    n4 = x4.size
    n8 = x8.size

    x4_slab, tiles4, tr4 = _lane_dense_slab(x4.reshape(-1), _LANES, _MAX_TILE_ROWS)
    x8_slab, tiles8, tr8 = _lane_dense_slab(x8.reshape(-1), _LANES, _MAX_TILE_ROWS)

    # ---- Pass 1: BatchNorm batch statistics over the /4 slab (single sweep). ----
    psum, psq = pl.pallas_call(
        functools.partial(_stats_kernel, total=n4, tile_rows=tr4, lanes=_LANES),
        out_shape=(
            jax.ShapeDtypeStruct((1, _LANES), jnp.float32),
            jax.ShapeDtypeStruct((1, _LANES), jnp.float32),
        ),
        grid=(tiles4,),
        in_specs=[
            pl.BlockSpec(memory_space=pltpu.MemorySpace.SMEM),      # params
            pl.BlockSpec((tr4, _LANES), lambda i: (i, 0)),          # x4 tiles
        ],
        out_specs=(
            pl.BlockSpec((1, _LANES), lambda i: (0, 0)),            # per-lane sum
            pl.BlockSpec((1, _LANES), lambda i: (0, 0)),            # per-lane sumsq
        ),
        compiler_params=pltpu.CompilerParams(
            dimension_semantics=("arbitrary",),                     # accumulator axis
            vmem_limit_bytes=32 * 1024 * 1024,
        ),
    )(params, x4_slab)

    # ---- Finalize BN and fold BN + conv3 into a single affine (a, c). ------------
    # Tiny scalar math (a dozen flops) done outside the kernel.
    w1, b1, w2, b2 = params[0], params[1], params[2], params[3]
    gamma, beta, w3, b3 = params[4], params[5], params[6], params[7]
    total_sum = jnp.sum(psum)
    total_sq = jnp.sum(psq)
    mean = total_sum / n4
    var = jnp.maximum(total_sq / n4 - mean * mean, 0.0)   # biased (training-mode) var
    inv_std = lax.rsqrt(var + BN_EPS)
    a = w3 * gamma * inv_std
    c = w3 * (beta - gamma * mean * inv_std) + b3
    coefs = jnp.stack([w1, b1, w2, b2, a, c]).astype(jnp.float32)

    # ---- Pass 2: conv1+ReLU+conv2 recomputed on the /8 subset, then the fused ----
    # BN+conv3 affine.  Output is already at final resolution (no re-gather).
    out_slab = pl.pallas_call(
        _out_kernel,
        out_shape=jax.ShapeDtypeStruct(x8_slab.shape, jnp.float32),
        grid=(tiles8,),
        in_specs=[
            pl.BlockSpec(memory_space=pltpu.MemorySpace.SMEM),      # coefs
            pl.BlockSpec((tr8, _LANES), lambda i: (i, 0)),          # x8 tiles
        ],
        out_specs=pl.BlockSpec((tr8, _LANES), lambda i: (i, 0)),
        compiler_params=pltpu.CompilerParams(
            dimension_semantics=("parallel",),                      # v7x: both TCs
            vmem_limit_bytes=32 * 1024 * 1024,
        ),
    )(coefs, x8_slab)

    return out_slab.reshape(-1)[:n8].reshape(N, C, H8, W8)


def reference_forward(x, params):
    """Pure-JAX reference matching the PyTorch module semantics (training-mode BN)."""
    w1, b1, w2, b2, gamma, beta, w3, b3 = [params[i] for i in range(8)]
    y = jnp.maximum(w1 * x[:, :, ::2, ::2] + b1, 0.0)           # conv1 + relu
    y = w2 * y[:, :, ::2, ::2] + b2                             # conv2
    m = jnp.mean(y)
    v = jnp.mean((y - m) ** 2)
    y = gamma * (y - m) / jnp.sqrt(v + BN_EPS) + beta           # bn (batch stats)
    return w3 * y[:, :, ::2, ::2] + b3                          # conv3


if __name__ == "__main__":
    key = jax.random.PRNGKey(0)

    # Input consistent with the module (channels fixed at 1 by __init__).
    N, C, H, W = 2, 1, 16, 16
    x = jax.random.normal(key, (N, C, H, W), dtype=jnp.float32)

    # Deterministic, well-conditioned parameters (within PyTorch's U(-1,1) init range
    # for a 1x1 conv with fan_in=1).  BN gamma/beta set to non-trivial values to
    # exercise the fused BN+conv3 affine.
    params = jnp.array(
        [0.7, 0.1,      # w1, b1
         -0.8, 0.3,     # w2, b2
         1.2, -0.3,     # gamma, beta
         0.6, -0.2],    # w3, b3
        dtype=jnp.float32,
    )

    fwd = jax.jit(model_forward)

    out = jax.block_until_ready(fwd(x, params))
    ref = reference_forward(x, params)
    assert out.shape == (N, C, H // 8, W // 8), out.shape
    assert jnp.allclose(out, ref, atol=1e-4, rtol=1e-4), (out, ref)

    # Second, non-square shape exercising the same tiling path.
    x2 = jax.random.normal(jax.random.PRNGKey(1), (1, 1, 64, 96), dtype=jnp.float32)
    out2 = jax.block_until_ready(fwd(x2, params))
    ref2 = reference_forward(x2, params)
    assert out2.shape == (1, 1, 8, 12), out2.shape
    assert jnp.allclose(out2, ref2, atol=1e-4, rtol=1e-4), (out2, ref2)

    print("KERNEL_OK")
</pallas_src>

<mosaic_0001>
module attributes {stable_mosaic.version = 11 : i64} {
  func.func @_stats_kernel(%arg0: i32, %arg1: memref<8xf32, #tpu.memory_space<smem>>, %arg2: memref<8x512xf32, #tpu.memory_space<vmem>>, %arg3: memref<1x512xf32, #tpu.memory_space<vmem>>, %arg4: memref<1x512xf32, #tpu.memory_space<vmem>>) attributes {dimension_semantics = [#tpu.dimension_semantics<arbitrary>], iteration_bounds = array<i64: 1>, scalar_prefetch = 0 : i64, scratch_operands = 0 : i64, tpu.core_type = #tpu.core_type<tc>, window_params = [{transform_indices = @transform_0, window_bounds = array<i64: 8>}, {transform_indices = @transform_1, window_bounds = array<i64: 8, 512>}, {pipeline_mode = #tpu.pipeline_mode<synchronous>, transform_indices = @transform_2, window_bounds = array<i64: 1, 512>}, {pipeline_mode = #tpu.pipeline_mode<synchronous>, transform_indices = @transform_3, window_bounds = array<i64: 1, 512>}]} {
    %c0 = arith.constant 0 : index
    %0 = memref.load %arg1[%c0] : memref<8xf32, #tpu.memory_space<smem>>
    %c1 = arith.constant 1 : index
    %1 = memref.load %arg1[%c1] : memref<8xf32, #tpu.memory_space<smem>>
    %c2 = arith.constant 2 : index
    %2 = memref.load %arg1[%c2] : memref<8xf32, #tpu.memory_space<smem>>
    %c3 = arith.constant 3 : index
    %3 = memref.load %arg1[%c3] : memref<8xf32, #tpu.memory_space<smem>>
    %c0_0 = arith.constant 0 : index
    %c0_1 = arith.constant 0 : index
    %4 = vector.load %arg2[%c0_0, %c0_1] : memref<8x512xf32, #tpu.memory_space<vmem>>, vector<8x512xf32>
    %5 = vector.broadcast %0 : f32 to vector<8x512xf32>
    %6 = arith.mulf %5, %4 : vector<8x512xf32>
    %7 = vector.broadcast %1 : f32 to vector<8x512xf32>
    %8 = arith.addf %6, %7 : vector<8x512xf32>
    %cst = arith.constant 0.000000e+00 : f32
    %9 = vector.broadcast %cst : f32 to vector<8x512xf32>
    %10 = arith.maximumf %8, %9 : vector<8x512xf32>
    %11 = vector.broadcast %2 : f32 to vector<8x512xf32>
    %12 = arith.mulf %11, %10 : vector<8x512xf32>
    %13 = vector.broadcast %3 : f32 to vector<8x512xf32>
    %14 = arith.addf %12, %13 : vector<8x512xf32>
    %15 = tpu.iota {dimensions = array<i32: 0>} : vector<8x512xi32>
    %16 = tpu.iota {dimensions = array<i32: 1>} : vector<8x512xi32>
    %c8_i32 = arith.constant 8 : i32
    %17 = arith.muli %arg0, %c8_i32 : i32
    %18 = vector.broadcast %17 : i32 to vector<8x512xi32>
    %19 = arith.addi %18, %15 : vector<8x512xi32>
    %c512_i32 = arith.constant 512 : i32
    %20 = vector.broadcast %c512_i32 : i32 to vector<8x512xi32>
    %21 = arith.muli %19, %20 : vector<8x512xi32>
    %22 = arith.addi %21, %16 : vector<8x512xi32>
    %c32_i32 = arith.constant 32 : i32
    %23 = vector.broadcast %c32_i32 : i32 to vector<8x512xi32>
    %24 = arith.cmpi slt, %22, %23 : vector<8x512xi32>
    %cst_2 = arith.constant 0.000000e+00 : f32
    %25 = vector.broadcast %cst_2 : f32 to vector<8x512xf32>
    %26 = arith.select %24, %14, %25 : vector<8x512xi1>, vector<8x512xf32>
    %c0_i32 = arith.constant 0 : i32
    %27 = arith.cmpi eq, %arg0, %c0_i32 : i32
    %28 = arith.extui %27 : i1 to i32
    %c0_i32_3 = arith.constant 0 : i32
    %29 = arith.cmpi ne, %28, %c0_i32_3 : i32
    scf.if %29 {
      %cst_14 = arith.constant 0.000000e+00 : f32
      %41 = vector.broadcast %cst_14 : f32 to vector<1x512xf32>
      %c0_15 = arith.constant 0 : index
      %c0_16 = arith.constant 0 : index
      %42 = vector.load %arg3[%c0_15, %c0_16] : memref<1x512xf32, #tpu.memory_space<vmem>>, vector<1x512xf32>
      tpu.vector_store %arg3[%c0_15, %c0_16], %41 {strides = array<i32>} : memref<1x512xf32, #tpu.memory_space<vmem>>, vector<1x512xf32>,
      %cst_17 = arith.constant 0.000000e+00 : f32
      %43 = vector.broadcast %cst_17 : f32 to vector<1x512xf32>
      %c0_18 = arith.constant 0 : index
      %c0_19 = arith.constant 0 : index
      %44 = vector.load %arg4[%c0_18, %c0_19] : memref<1x512xf32, #tpu.memory_space<vmem>>, vector<1x512xf32>
      tpu.vector_store %arg4[%c0_18, %c0_19], %43 {strides = array<i32>} : memref<1x512xf32, #tpu.memory_space<vmem>>, vector<1x512xf32>,
    } else {
    }
    %c0_4 = arith.constant 0 : index
    %c0_5 = arith.constant 0 : index
    %30 = vector.load %arg3[%c0_4, %c0_5] : memref<1x512xf32, #tpu.memory_space<vmem>>, vector<1x512xf32>
    %cst_6 = arith.constant dense<0.000000e+00> : vector<512xf32>
    %31 = vector.multi_reduction <add>, %26, %cst_6 [0] : vector<8x512xf32> to vector<512xf32>
    %32 = vector.shape_cast %31 : vector<512xf32> to vector<1x512xf32>
    %33 = arith.addf %30, %32 : vector<1x512xf32>
    %c0_7 = arith.constant 0 : index
    %c0_8 = arith.constant 0 : index
    %34 = vector.load %arg3[%c0_7, %c0_8] : memref<1x512xf32, #tpu.memory_space<vmem>>, vector<1x512xf32>
    tpu.vector_store %arg3[%c0_7, %c0_8], %33 {strides = array<i32>} : memref<1x512xf32, #tpu.memory_space<vmem>>, vector<1x512xf32>,
    %c0_9 = arith.constant 0 : index
    %c0_10 = arith.constant 0 : index
    %35 = vector.load %arg4[%c0_9, %c0_10] : memref<1x512xf32, #tpu.memory_space<vmem>>, vector<1x512xf32>
    %36 = arith.mulf %26, %26 : vector<8x512xf32>
    %cst_11 = arith.constant dense<0.000000e+00> : vector<512xf32>
    %37 = vector.multi_reduction <add>, %36, %cst_11 [0] : vector<8x512xf32> to vector<512xf32>
    %38 = vector.shape_cast %37 : vector<512xf32> to vector<1x512xf32>
    %39 = arith.addf %35, %38 : vector<1x512xf32>
    %c0_12 = arith.constant 0 : index
    %c0_13 = arith.constant 0 : index
    %40 = vector.load %arg4[%c0_12, %c0_13] : memref<1x512xf32, #tpu.memory_space<vmem>>, vector<1x512xf32>
    tpu.vector_store %arg4[%c0_12, %c0_13], %39 {strides = array<i32>} : memref<1x512xf32, #tpu.memory_space<vmem>>, vector<1x512xf32>,
    return
  }
  func.func @transform_0(%arg0: i32) -> i32 {
    %c0_i32 = arith.constant 0 : i32
    %c0_i32_0 = arith.constant 0 : i32
    return %c0_i32 : i32
  }
  func.func @transform_1(%arg0: i32) -> (i32, i32) {
    %c0_i32 = arith.constant 0 : i32
    %c0_i32_0 = arith.constant 0 : i32
    return %arg0, %c0_i32 : i32, i32
  }
  func.func @transform_2(%arg0: i32) -> (i32, i32) {
    %c0_i32 = arith.constant 0 : i32
    %c0_i32_0 = arith.constant 0 : i32
    %c0_i32_1 = arith.constant 0 : i32
    return %c0_i32, %c0_i32_0 : i32, i32
  }
  func.func @transform_3(%arg0: i32) -> (i32, i32) {
    %c0_i32 = arith.constant 0 : i32
    %c0_i32_0 = arith.constant 0 : i32
    %c0_i32_1 = arith.constant 0 : i32
    return %c0_i32, %c0_i32_0 : i32, i32
  }
}

module attributes {stable_mosaic.version = 11 : i64} {
  func.func @_out_kernel(%arg0: i32, %arg1: memref<6xf32, #tpu.memory_space<smem>>, %arg2: memref<8x512xf32, #tpu.memory_space<vmem>>, %arg3: memref<8x512xf32, #tpu.memory_space<vmem>>) attributes {dimension_semantics = [#tpu.dimension_semantics<parallel>], iteration_bounds = array<i64: 1>, scalar_prefetch = 0 : i64, scratch_operands = 0 : i64, tpu.core_type = #tpu.core_type<tc>, window_params = [{transform_indices = @transform_0, window_bounds = array<i64: 6>}, {transform_indices = @transform_1, window_bounds = array<i64: 8, 512>}, {transform_indices = @transform_2, window_bounds = array<i64: 8, 512>}]} {
    %c0 = arith.constant 0 : index
    %0 = memref.load %arg1[%c0] : memref<6xf32, #tpu.memory_space<smem>>
    %c1 = arith.constant 1 : index
    %1 = memref.load %arg1[%c1] : memref<6xf32, #tpu.memory_space<smem>>
    %c2 = arith.constant 2 : index
    %2 = memref.load %arg1[%c2] : memref<6xf32, #tpu.memory_space<smem>>
    %c3 = arith.constant 3 : index
    %3 = memref.load %arg1[%c3] : memref<6xf32, #tpu.memory_space<smem>>
    %c4 = arith.constant 4 : index
    %4 = memref.load %arg1[%c4] : memref<6xf32, #tpu.memory_space<smem>>
    %c5 = arith.constant 5 : index
    %5 = memref.load %arg1[%c5] : memref<6xf32, #tpu.memory_space<smem>>
    %c0_0 = arith.constant 0 : index
    %c0_1 = arith.constant 0 : index
    %6 = vector.load %arg2[%c0_0, %c0_1] : memref<8x512xf32, #tpu.memory_space<vmem>>, vector<8x512xf32>
    %7 = vector.broadcast %0 : f32 to vector<8x512xf32>
    %8 = arith.mulf %7, %6 : vector<8x512xf32>
    %9 = vector.broadcast %1 : f32 to vector<8x512xf32>
    %10 = arith.addf %8, %9 : vector<8x512xf32>
    %cst = arith.constant 0.000000e+00 : f32
    %11 = vector.broadcast %cst : f32 to vector<8x512xf32>
    %12 = arith.maximumf %10, %11 : vector<8x512xf32>
    %13 = vector.broadcast %2 : f32 to vector<8x512xf32>
    %14 = arith.mulf %13, %12 : vector<8x512xf32>
    %15 = vector.broadcast %3 : f32 to vector<8x512xf32>
    %16 = arith.addf %14, %15 : vector<8x512xf32>
    %17 = vector.broadcast %4 : f32 to vector<8x512xf32>
    %18 = arith.mulf %17, %16 : vector<8x512xf32>
    %19 = vector.broadcast %5 : f32 to vector<8x512xf32>
    %20 = arith.addf %18, %19 : vector<8x512xf32>
    %c0_2 = arith.constant 0 : index
    %c0_3 = arith.constant 0 : index
    %21 = vector.load %arg3[%c0_2, %c0_3] : memref<8x512xf32, #tpu.memory_space<vmem>>, vector<8x512xf32>
    tpu.vector_store %arg3[%c0_2, %c0_3], %20 {strides = array<i32>} : memref<8x512xf32, #tpu.memory_space<vmem>>, vector<8x512xf32>,
    return
  }
  func.func @transform_0(%arg0: i32) -> i32 {
    %c0_i32 = arith.constant 0 : i32
    %c0_i32_0 = arith.constant 0 : i32
    return %c0_i32 : i32
  }
  func.func @transform_1(%arg0: i32) -> (i32, i32) {
    %c0_i32 = arith.constant 0 : i32
    %c0_i32_0 = arith.constant 0 : i32
    return %arg0, %c0_i32 : i32, i32
  }
  func.func @transform_2(%arg0: i32) -> (i32, i32) {
    %c0_i32 = arith.constant 0 : i32
    %c0_i32_0 = arith.constant 0 : i32
    return %arg0, %c0_i32 : i32, i32
  }
}

</mosaic_0001>

<llo_original>
// kernel: model_forward.3
$region0: #{model_forward.3}
  #allocation0 [shape = 'u32[]', space=smem, size = 0x4, offset = 0x4, fixed_abs, tag = 'smem constant byte address 0x4 - core index']
  #allocation1 [shape = 'u32[144,128]{1,0:T(1,128)}', space=vmem, size = 0x12000, scoped, tag = 'internal scratch']
  %s0 = inlined_call_operand.vmem [shape: f32[6], index: 0, kind: input, shape index: {}]
  %s1 = inlined_call_operand.vmem [shape: f32[8,512], index: 1, kind: input, shape index: {}]
  %s2 = inlined_call_operand.vmem [shape: f32[8,512], index: 2, kind: output, shape index: {}]
  %s3 = sld [smem:[#allocation0]]
  $region22: #{model_forward.3} parent=0
    _
  %s5 = ssub.s32 1, %s3
  %s6 = scalar_select 0, %s5, %s3
  $region1: #{model_forward.3} parent=0
    #allocation2 [shape = 'u8[512]{0}', space=smem, size = 0x200, scoped, tag = 'input window, operand 0, single buffered']
    #allocation3 [shape = 's32[1]{0}', space=sflag, size = 0x4, scoped, tag = 'scoped memory for model_forward.3']
    %7 = vsyncpa [#allocation3], 0
    // Predicated region
    $region2: #{model_forward.3} parent=1 // pred_check
      _
    $region3: #{model_forward.3} parent=1 // pred_check_branch
      %9 = sbr.rel (0) target = $region5
    $region4: #{model_forward.3} parent=1 // pred_region
      %s11 = ssub.s32 16, 16
      %12 = vsyncadd [#allocation3], %s11
      %s14 = sshll.u32 %s0, 4
      %s15 = int_to_ptr.vmem [resolvable:$true] %s14
      %17 = dma.vmem_to_smem %s15, 16, [#allocation2], [#allocation3]
    $region5: #{model_forward.3} parent=1 // pred_fallthru
      _
    // Predicated region
    $region6: #{model_forward.3} parent=1 // pred_check
      _
    $region7: #{model_forward.3} parent=1 // pred_check_branch
      %19 = sbr.rel (0) target = $region9
    $region8: #{model_forward.3} parent=1 // pred_region
      _
    $region9: #{model_forward.3} parent=1 // pred_fallthru
      _
    // Predicated region
    $region10: #{model_forward.3} parent=1 // pred_check
      _
    $region11: #{model_forward.3} parent=1 // pred_check_branch
      %21 = sbr.rel (0) target = $region13
    $region12: #{model_forward.3} parent=1 // pred_region
      %22 = dma.done [#allocation3], 16
    $region13: #{model_forward.3} parent=1 // pred_fallthru
      _
    %23 = sfence
    %s24 = sld [smem:[#allocation2]]
    %s25 = sld [smem:[#allocation2 + $0x1]]
    %s26 = sld [smem:[#allocation2 + $0x2]]
    %s27 = sld [smem:[#allocation2 + $0x3]]
    %s28 = sld [smem:[#allocation2 + $0x4]]
    %s29 = sld [smem:[#allocation2 + $0x5]]
    %v30 = vld [vmem:[%s1] sm:$0xff]
    %v31 = vld [vmem:[%s1 + $0x8] sm:$0xff]
    %v32 = vld [vmem:[%s1 + $0x10] sm:$0xff]
    %v33 = vld [vmem:[%s1 + $0x18] sm:$0xff]
    %v34 = vstv %s24
    %v35 = vmul.f32 %v34, %v30
    %v36 = vmul.f32 %v34, %v31
    %v37 = vmul.f32 %v34, %v32
    %v38 = vmul.f32 %v34, %v33
    %v39 = vstv %s25
    %v40 = vadd.f32 %v35, %v39
    %v41 = vadd.f32 %v36, %v39
    %v42 = vadd.f32 %v37, %v39
    %v43 = vadd.f32 %v38, %v39
    %v44 = vmax.f32 %v40, 0.0
    %v45 = vmax.f32 %v41, 0.0
    %v46 = vmax.f32 %v42, 0.0
    %v47 = vmax.f32 %v43, 0.0
    %v48 = vstv %s26
    %v49 = vmul.f32 %v48, %v44
    %v50 = vmul.f32 %v48, %v45
    %v51 = vmul.f32 %v48, %v46
    %v52 = vmul.f32 %v48, %v47
    %v53 = vstv %s27
    %v54 = vadd.f32 %v49, %v53
    %v55 = vadd.f32 %v50, %v53
    %v56 = vadd.f32 %v51, %v53
    %v57 = vadd.f32 %v52, %v53
    %v58 = vstv %s28
    %v59 = vmul.f32 %v58, %v54
    %v60 = vmul.f32 %v58, %v55
    %v61 = vmul.f32 %v58, %v56
    %v62 = vmul.f32 %v58, %v57
    %v63 = vstv %s29
    %v64 = vadd.f32 %v59, %v63
    %v65 = vadd.f32 %v60, %v63
    %v66 = vadd.f32 %v61, %v63
    %v67 = vadd.f32 %v62, %v63
    %68 = vst [vmem:[%s2] sm:$0xff] %v64
    %69 = vst [vmem:[%s2 + $0x8] sm:$0xff] %v65
    %70 = vst [vmem:[%s2 + $0x10] sm:$0xff] %v66
    %71 = vst [vmem:[%s2 + $0x18] sm:$0xff] %v67
    // Predicated region
    $region14: #{model_forward.3} parent=1 // pred_check
      _
    $region15: #{model_forward.3} parent=1 // pred_check_branch
      %73 = sbr.rel (0) target = $region17
    $region16: #{model_forward.3} parent=1 // pred_region
      _
    $region17: #{model_forward.3} parent=1 // pred_fallthru
      _
    // Predicated region
    $region18: #{model_forward.3} parent=1 // pred_check
      _
    $region19: #{model_forward.3} parent=1 // pred_check_branch
      %75 = sbr.rel (0) target = $region21
    $region20: #{model_forward.3} parent=1 // pred_region
      _
    $region21: #{model_forward.3} parent=1 // pred_fallthru
      _
    %76 = vsyncpa [#allocation3], 1

// kernel: model_forward.2
$region0: #{model_forward.2}
  #allocation0 [shape = 'u32[]', space=smem, size = 0x4, offset = 0x4, fixed_abs, tag = 'smem constant byte address 0x4 - core index']
  #allocation1 [shape = 'u32[144,128]{1,0:T(1,128)}', space=vmem, size = 0x12000, scoped, tag = 'internal scratch']
  %s0 = inlined_call_operand.vmem [shape: f32[8], index: 0, kind: input, shape index: {}]
  %s1 = inlined_call_operand.vmem [shape: f32[8,512], index: 1, kind: input, shape index: {}]
  %s2 = inlined_call_operand.vmem [shape: f32[1,512], index: 2, kind: output, shape index: {0}]
  %s3 = inlined_call_operand.vmem [shape: f32[1,512], index: 3, kind: output, shape index: {1}]
  %4 = xla_tuple %s2, %s3
  %s5 = sld [smem:[#allocation0]]
  $region34: #{model_forward.2} parent=0
    _
  %s7 = ssub.s32 1, %s5
  %s8 = scalar_select 0, %s7, %s5
  $region1: #{model_forward.2} parent=0
    #allocation2 [shape = 'u8[512]{0}', space=smem, size = 0x200, scoped, tag = 'input window, operand 0, single buffered']
    #allocation3 [shape = 's32[1]{0}', space=sflag, size = 0x4, scoped, tag = 'scoped memory for model_forward.2']
    %9 = vsyncpa [#allocation3], 0
    // Predicated region
    $region2: #{model_forward.2} parent=1 // pred_check
      _
    $region3: #{model_forward.2} parent=1 // pred_check_branch
      %11 = sbr.rel (0) target = $region5
    $region4: #{model_forward.2} parent=1 // pred_region
      %s13 = ssub.s32 16, 16
      %14 = vsyncadd [#allocation3], %s13
      %s16 = sshll.u32 %s0, 4
      %s17 = int_to_ptr.vmem [resolvable:$true] %s16
      %19 = dma.vmem_to_smem %s17, 16, [#allocation2], [#allocation3]
    $region5: #{model_forward.2} parent=1 // pred_fallthru
      _
    // Predicated region
    $region6: #{model_forward.2} parent=1 // pred_check
      _
    $region7: #{model_forward.2} parent=1 // pred_check_branch
      %21 = sbr.rel (0) target = $region9
    $region8: #{model_forward.2} parent=1 // pred_region
      _
    $region9: #{model_forward.2} parent=1 // pred_fallthru
      _
    // Predicated region
    $region10: #{model_forward.2} parent=1 // pred_check
      _
    $region11: #{model_forward.2} parent=1 // pred_check_branch
      %23 = sbr.rel (0) target = $region13
    $region12: #{model_forward.2} parent=1 // pred_region
      %24 = dma.done [#allocation3], 16
    $region13: #{model_forward.2} parent=1 // pred_fallthru
      _
    %25 = sfence
    %s26 = sld [smem:[#allocation2]]
    %s27 = sld [smem:[#allocation2 + $0x1]]
    %s28 = sld [smem:[#allocation2 + $0x2]]
    %s29 = sld [smem:[#allocation2 + $0x3]]
    %v30 = vld [vmem:[%s1] sm:$0xff]
    %v31 = vld [vmem:[%s1 + $0x8] sm:$0xff]
    %v32 = vld [vmem:[%s1 + $0x10] sm:$0xff]
    %v33 = vld [vmem:[%s1 + $0x18] sm:$0xff]
    %v34 = vstv %s26
    %v35 = vmul.f32 %v34, %v30
    %v36 = vmul.f32 %v34, %v31
    %v37 = vmul.f32 %v34, %v32
    %v38 = vmul.f32 %v34, %v33
    %v39 = vstv %s27
    %v40 = vadd.f32 %v35, %v39
    %v41 = vadd.f32 %v36, %v39
    %v42 = vadd.f32 %v37, %v39
    %v43 = vadd.f32 %v38, %v39
    %v44 = vmax.f32 %v40, 0.0
    %v45 = vmax.f32 %v41, 0.0
    %v46 = vmax.f32 %v42, 0.0
    %v47 = vmax.f32 %v43, 0.0
    %v48 = vstv %s28
    %v49 = vmul.f32 %v48, %v44
    %v50 = vmul.f32 %v48, %v45
    %v51 = vmul.f32 %v48, %v46
    %v52 = vmul.f32 %v48, %v47
    %v53 = vstv %s29
    %v54 = vadd.f32 %v49, %v53
    %v55 = vadd.f32 %v50, %v53
    %v56 = vadd.f32 %v51, %v53
    %v57 = vadd.f32 %v52, %v53
    %v58 = vlaneseq
    %v59 = vshrl.u32 %v58, 7
    %v60 = vlaneseq
    %v61 = vand.u32 %v60, 127
    %v62 = vadd.s32 %v61, 128
    %v63 = vadd.s32 %v61, 256
    %v64 = vadd.s32 %v61, 384
    %s65 = smul.u32 0, 8
    %v66 = vstv %s65
    %v67 = vadd.s32 %v66, %v59
    %v68 = vmul.u32 %v67, 512
    %v69 = vadd.s32 %v68, %v61
    %v70 = vadd.s32 %v68, %v62
    %v71 = vadd.s32 %v68, %v63
    %v72 = vadd.s32 %v68, %v64
    %vm73 = vcmp.lt.s32.totalorder %v69, 32
    %vm74 = vcmp.lt.s32.totalorder %v70, 32
    %vm75 = vcmp.lt.s32.totalorder %v71, 32
    %vm76 = vcmp.lt.s32.totalorder %v72, 32
    %v77 = vsel %vm73, %v54, 0.0
    %v78 = vsel %vm74, %v55, 0.0
    %v79 = vsel %vm75, %v56, 0.0
    %v80 = vsel %vm76, %v57, 0.0
    %p81 = scmp.eq.s32.totalorder 0, 0
    // Predicated region
    $region14: #{model_forward.2} parent=1 // pred_check
      %p82 = pneg %p81
    $region15: #{model_forward.2} parent=1 // pred_check_branch
      %84 = sbr.rel (%p82) target = $region17
    $region16: #{model_forward.2} parent=1 // pred_region
      %v85 = vlaneseq
      %vm86 = vcmp.ge.s32.totalorder %v85, 0
      %vm87 = vcmp.lt.s32.totalorder %v85, 512
      %vm88 = vmand %vm86, %vm87
      %89 = vst.msk [vmem:[%s2] sm:$0xf] %vm88, 0.0
      %90 = vst.msk [vmem:[%s3] sm:$0xf] %vm88, 0.0
    $region17: #{model_forward.2} parent=1 // pred_fallthru
      _
    %v91 = vld [vmem:[%s2] sm:$0xf]
    %v92 = vrot.slane %v77, 4
    %v93 = vadd.f32 %v77, %v92
    %v94 = vrot.slane %v93, 2
    %v95 = vadd.f32 %v93, %v94
    %v96 = vrot.slane %v95, 1
    %v97 = vadd.f32 %v95, %v96
    %v98 = vrot.slane %v78, 4
    %v99 = vadd.f32 %v78, %v98
    %v100 = vrot.slane %v99, 2
    %v101 = vadd.f32 %v99, %v100
    %v102 = vrot.slane %v101, 1
    %v103 = vadd.f32 %v101, %v102
    %v104 = vrot.slane %v79, 4
    %v105 = vadd.f32 %v79, %v104
    %v106 = vrot.slane %v105, 2
    %v107 = vadd.f32 %v105, %v106
    %v108 = vrot.slane %v107, 1
    %v109 = vadd.f32 %v107, %v108
    %v110 = vrot.slane %v80, 4
    %v111 = vadd.f32 %v80, %v110
    %v112 = vrot.slane %v111, 2
    %v113 = vadd.f32 %v111, %v112
    %v114 = vrot.slane %v113, 1
    %v115 = vadd.f32 %v113, %v114
    %v120 = vcombine.low %v97, %v103
    %v121 = vcombine.low %v109, %v115
    %v123 = vunpack.c.l.s4 1966171168
    %v124 = vunpack.c.0.s8 %v123
    %v125 = vlaneseq
    %v126 = vshrl.u32 %v125, 7
    %v127 = vsub.s32 %v124, %v126
    %v128 = vrot.slane %v120, %v127
    %v130 = vunpack.c.l.s4 1966171168
    %v131 = vunpack.c.0.s8 %v130
    %v132 = vlaneseq
    %v133 = vshrl.u32 %v132, 7
    %v134 = vsub.s32 %v131, %v133
    %v135 = vrot.slane %v121, %v134
    %v136 = vcombine.low %v128, %v135
    %v138 = vunpack.c.l.s4 1966171168
    %v139 = vunpack.c.0.s8 %v138
    %v140 = vlaneseq
    %v141 = vshrl.u32 %v140, 7
    %v142 = vsub.s32 %v139, %v141
    %v143 = vrot.slane %v136, %v142
    %v145 = vadd.f32 %v91, %v143
    %v146 = vlaneseq
    %vm147 = vcmp.ge.s32.totalorder %v146, 0
    %vm148 = vcmp.lt.s32.totalorder %v146, 512
    %vm149 = vmand %vm147, %vm148
    %150 = vst.msk [vmem:[%s2] sm:$0xf] %vm149, %v145
    %v151 = vld [vmem:[%s3] sm:$0xf]
    %v152 = vmul.f32 %v77, %v77
    %v153 = vmul.f32 %v78, %v78
    %v154 = vmul.f32 %v79, %v79
    %v155 = vmul.f32 %v80, %v80
    %v156 = vrot.slane %v152, 4
    %v157 = vadd.f32 %v152, %v156
    %v158 = vrot.slane %v157, 2
    %v159 = vadd.f32 %v157, %v158
    %v160 = vrot.slane %v159, 1
    %v161 = vadd.f32 %v159, %v160
    %v162 = vrot.slane %v153, 4
    %v163 = vadd.f32 %v153, %v162
    %v164 = vrot.slane %v163, 2
    %v165 = vadd.f32 %v163, %v164
    %v166 = vrot.slane %v165, 1
    %v167 = vadd.f32 %v165, %v166
    %v168 = vrot.slane %v154, 4
    %v169 = vadd.f32 %v154, %v168
    %v170 = vrot.slane %v169, 2
    %v171 = vadd.f32 %v169, %v170
    %v172 = vrot.slane %v171, 1
    %v173 = vadd.f32 %v171, %v172
    %v174 = vrot.slane %v155, 4
    %v175 = vadd.f32 %v155, %v174
    %v176 = vrot.slane %v175, 2
    %v177 = vadd.f32 %v175, %v176
    %v178 = vrot.slane %v177, 1
    %v179 = vadd.f32 %v177, %v178
    %v184 = vcombine.low %v161, %v167
    %v185 = vcombine.low %v173, %v179
    %v187 = vunpack.c.l.s4 1966171168
    %v188 = vunpack.c.0.s8 %v187
    %v189 = vlaneseq
    %v190 = vshrl.u32 %v189, 7
    %v191 = vsub.s32 %v188, %v190
    %v192 = vrot.slane %v184, %v191
    %v194 = vunpack.c.l.s4 1966171168
    %v195 = vunpack.c.0.s8 %v194
    %v196 = vlaneseq
    %v197 = vshrl.u32 %v196, 7
    %v198 = vsub.s32 %v195, %v197
    %v199 = vrot.slane %v185, %v198
    %v200 = vcombine.low %v192, %v199
    %v202 = vunpack.c.l.s4 1966171168
    %v203 = vunpack.c.0.s8 %v202
    %v204 = vlaneseq
    %v205 = vshrl.u32 %v204, 7
    %v206 = vsub.s32 %v203, %v205
    %v207 = vrot.slane %v200, %v206
    %v209 = vadd.f32 %v151, %v207
    %210 = vst.msk [vmem:[%s3] sm:$0xf] %vm149, %v209
    // Predicated region
    $region18: #{model_forward.2} parent=1 // pred_check
      _
    $region19: #{model_forward.2} parent=1 // pred_check_branch
      %212 = sbr.rel (0) target = $region21
    $region20: #{model_forward.2} parent=1 // pred_region
      _
    $region21: #{model_forward.2} parent=1 // pred_fallthru
      _
    // Predicated region
    $region22: #{model_forward.2} parent=1 // pred_check
      _
    $region23: #{model_forward.2} parent=1 // pred_check_branch
      %214 = sbr.rel (0) target = $region25
    $region24: #{model_forward.2} parent=1 // pred_region
      _
    $region25: #{model_forward.2} parent=1 // pred_fallthru
      _
    // Predicated region
    $region26: #{model_forward.2} parent=1 // pred_check
      _
    $region27: #{model_forward.2} parent=1 // pred_check_branch
      %216 = sbr.rel (0) target = $region29
    $region28: #{model_forward.2} parent=1 // pred_region
      _
    $region29: #{model_forward.2} parent=1 // pred_fallthru
      _
    // Predicated region
    $region30: #{model_forward.2} parent=1 // pred_check
      _
    $region31: #{model_forward.2} parent=1 // pred_check_branch
      %218 = sbr.rel (0) target = $region33
    $region32: #{model_forward.2} parent=1 // pred_region
      _
    $region33: #{model_forward.2} parent=1 // pred_fallthru
      _
    %219 = vsyncpa [#allocation3], 1

</llo_original>
